<compile_context>
chip_gen: v7x
topology: tpu7x:2x2x1
jax: 0.10.0
libtpu: 0.0.40
codegen_flags: <defaults>
</compile_context>

<pallas_src>
import jax
import jax.numpy as jnp
from jax.experimental import pallas as pl
from jax.experimental.pallas import tpu as pltpu

ZDIM = 7
H1, H2, H3, OUT = 16, 32, 64, 90
OUT_PAD = 128          # lane-dense padded output width
LN_EPS = 1e-5

# ---- packed parameter slab layout ([SLAB_ROWS, 128] f32) --------------------
_W1_R0 = 0                      # rows   0..6   : w1 [7, 16]
_W2_R0 = 8                      # rows   8..23  : w2 [16, 32]
_W3_R0 = 24                     # rows  24..55  : w3 [32, 64]
_W4_R0 = 56                     # rows  56..119 : w4 [64, 128] (cols 90..127 = 0)
_B1_R, _G1_R, _BT1_R = 120, 121, 122
_B2_R, _G2_R, _BT2_R = 123, 124, 125
_B3_R, _G3_R, _BT3_R = 126, 127, 128
_B4_R = 129
SLAB_ROWS = 136                 # 130 used rows, padded to a multiple of 8


def _round_up(x, m):
    return ((x + m - 1) // m) * m


def _layernorm(h, gamma, beta, n):
    # One-pass mean/variance: two cross-lane reductions instead of three.
    inv_n = 1.0 / float(n)
    mean = jnp.sum(h, axis=-1, keepdims=True) * inv_n
    msq = jnp.sum(h * h, axis=-1, keepdims=True) * inv_n
    var = jnp.maximum(msq - mean * mean, 0.0)
    hn = (h - mean) * jax.lax.rsqrt(var + LN_EPS)
    return hn * gamma + beta


def decoder_kernel(z_ref, p_ref, out_ref):
    z = z_ref[...]                                   # [TB, 7]

    # Static slices of the resident parameter slab (free / cheap VMEM loads).
    w1 = p_ref[_W1_R0:_W1_R0 + ZDIM, 0:H1]           # [7, 16]
    w2 = p_ref[_W2_R0:_W2_R0 + H1, 0:H2]             # [16, 32]
    w3 = p_ref[_W3_R0:_W3_R0 + H2, 0:H3]             # [32, 64]
    w4 = p_ref[_W4_R0:_W4_R0 + H3, 0:OUT_PAD]        # [64, 128]  (padded cols zero)

    b1 = p_ref[_B1_R:_B1_R + 1, 0:H1]
    g1 = p_ref[_G1_R:_G1_R + 1, 0:H1]
    bt1 = p_ref[_BT1_R:_BT1_R + 1, 0:H1]
    b2 = p_ref[_B2_R:_B2_R + 1, 0:H2]
    g2 = p_ref[_G2_R:_G2_R + 1, 0:H2]
    bt2 = p_ref[_BT2_R:_BT2_R + 1, 0:H2]
    b3 = p_ref[_B3_R:_B3_R + 1, 0:H3]
    g3 = p_ref[_G3_R:_G3_R + 1, 0:H3]
    bt3 = p_ref[_BT3_R:_BT3_R + 1, 0:H3]
    b4 = p_ref[_B4_R:_B4_R + 1, 0:OUT_PAD]           # [1, 128]   (padded cols zero)

    # Block 1: Linear(7,16) + LayerNorm(16) + ReLU
    h = jnp.dot(z, w1, preferred_element_type=jnp.float32) + b1
    h = jnp.maximum(_layernorm(h, g1, bt1, H1), 0.0)

    # Block 2: Linear(16,32) + LayerNorm(32) + ReLU
    h = jnp.dot(h, w2, preferred_element_type=jnp.float32) + b2
    h = jnp.maximum(_layernorm(h, g2, bt2, H2), 0.0)

    # Block 3: Linear(32,64) + LayerNorm(64) + ReLU
    h = jnp.dot(h, w3, preferred_element_type=jnp.float32) + b3
    h = jnp.maximum(_layernorm(h, g3, bt3, H3), 0.0)

    # Last: Linear(64, 90) padded to 128 output lanes (lane-dense store).
    out_ref[...] = jnp.dot(h, w4, preferred_element_type=jnp.float32) + b4


def pack_params(params):
    """Pack all weights/biases/LN params into one [SLAB_ROWS, 128] f32 slab."""
    slab = jnp.zeros((SLAB_ROWS, OUT_PAD), jnp.float32)
    slab = slab.at[_W1_R0:_W1_R0 + ZDIM, 0:H1].set(params["w1"])
    slab = slab.at[_W2_R0:_W2_R0 + H1, 0:H2].set(params["w2"])
    slab = slab.at[_W3_R0:_W3_R0 + H2, 0:H3].set(params["w3"])
    slab = slab.at[_W4_R0:_W4_R0 + H3, 0:OUT].set(params["w4"])
    for r, key, d in (
        (_B1_R, "b1", H1), (_G1_R, "g1", H1), (_BT1_R, "bt1", H1),
        (_B2_R, "b2", H2), (_G2_R, "g2", H2), (_BT2_R, "bt2", H2),
        (_B3_R, "b3", H3), (_G3_R, "g3", H3), (_BT3_R, "bt3", H3),
        (_B4_R, "b4", OUT),
    ):
        slab = slab.at[r:r + 1, 0:d].set(params[key])
    return slab


def init_params(key):
    """Deterministic init mimicking nn.Linear defaults (U[-1/sqrt(fan_in), +])."""
    dims = [(ZDIM, H1), (H1, H2), (H2, H3), (H3, OUT)]
    params = {}
    for i, (fin, fout) in enumerate(dims, start=1):
        key, kw, kb = jax.random.split(key, 3)
        bound = 1.0 / jnp.sqrt(float(fin))
        params[f"w{i}"] = jax.random.uniform(kw, (fin, fout), jnp.float32, -bound, bound)
        params[f"b{i}"] = jax.random.uniform(kb, (1, fout), jnp.float32, -bound, bound)
    # LayerNorm affine params: PyTorch default init (gamma=1, beta=0).
    for i, d in zip((1, 2, 3), (H1, H2, H3)):
        params[f"g{i}"] = jnp.ones((1, d), jnp.float32)
        params[f"bt{i}"] = jnp.zeros((1, d), jnp.float32)
    return params


def decoder_forward(z, params, *, block_rows=1024):
    batch = z.shape[0]
    slab = pack_params(params)

    # Batch tile: big enough to hide per-step overhead (~0.35us), small enough
    # that double-buffered [TB,128] f32 activations stay far under the scoped
    # VMEM limit on every generation (incl. v7x's 64 MiB physical VMEM).
    tb = min(block_rows, _round_up(batch, 8))
    padded = _round_up(batch, tb)
    if padded != batch:
        z = jnp.pad(z, ((0, padded - batch), (0, 0)))

    flops = 2 * padded * (ZDIM * H1 + H1 * H2 + H2 * H3 + H3 * OUT)
    bytes_accessed = padded * (ZDIM + OUT_PAD) * 4 + SLAB_ROWS * OUT_PAD * 4

    out = pl.pallas_call(
        decoder_kernel,
        out_shape=jax.ShapeDtypeStruct((padded, OUT_PAD), jnp.float32),
        grid=(padded // tb,),
        in_specs=[
            pl.BlockSpec((tb, ZDIM), lambda i: (i, 0)),          # z: streamed
            pl.BlockSpec((SLAB_ROWS, OUT_PAD), lambda i: (0, 0)),  # params: resident
        ],
        out_specs=pl.BlockSpec((tb, OUT_PAD), lambda i: (i, 0)),
        compiler_params=pltpu.CompilerParams(
            dimension_semantics=("parallel",),                   # megacore split on v7x
        ),
        cost_estimate=pl.CostEstimate(
            flops=flops,
            transcendentals=3 * padded,                          # one rsqrt per LN per row
            bytes_accessed=bytes_accessed,
        ),
    )(z, slab)
    return out[:batch, :OUT]


def decoder_reference(z, params):
    h = z
    for i, do_ln in ((1, True), (2, True), (3, True), (4, False)):
        h = h @ params[f"w{i}"] + params[f"b{i}"]
        if do_ln:
            mean = jnp.mean(h, axis=-1, keepdims=True)
            var = jnp.mean((h - mean) ** 2, axis=-1, keepdims=True)
            h = (h - mean) * jax.lax.rsqrt(var + LN_EPS)
            h = h * params[f"g{i}"] + params[f"bt{i}"]
            h = jnp.maximum(h, 0.0)
    return h


if __name__ == "__main__":
    key = jax.random.PRNGKey(0)
    kp, kz = jax.random.split(key)
    params = init_params(kp)

    batch = 8
    z = jax.random.normal(kz, (batch, ZDIM), jnp.float32)

    out = decoder_forward(z, params)
    jax.block_until_ready(out)

    ref = decoder_reference(z, params)
    assert out.shape == (batch, OUT)
    assert jnp.allclose(out, ref, atol=1e-4, rtol=1e-4)

    print("KERNEL_OK")
</pallas_src>

<mosaic_0001>
module attributes {stable_mosaic.version = 11 : i64} {
  func.func @decoder_kernel(%arg0: i32, %arg1: memref<8x7xf32, #tpu.memory_space<vmem>>, %arg2: memref<136x128xf32, #tpu.memory_space<vmem>>, %arg3: memref<8x128xf32, #tpu.memory_space<vmem>>) attributes {dimension_semantics = [#tpu.dimension_semantics<parallel>], iteration_bounds = array<i64: 1>, scalar_prefetch = 0 : i64, scratch_operands = 0 : i64, tpu.core_type = #tpu.core_type<tc>, window_params = [{transform_indices = @transform_0, window_bounds = array<i64: 8, 7>}, {pipeline_mode = #tpu.pipeline_mode<synchronous>, transform_indices = @transform_1, window_bounds = array<i64: 136, 128>}, {transform_indices = @transform_2, window_bounds = array<i64: 8, 128>}]} {
    %c0 = arith.constant 0 : index
    %c0_0 = arith.constant 0 : index
    %0 = vector.load %arg1[%c0, %c0_0] : memref<8x7xf32, #tpu.memory_space<vmem>>, vector<8x7xf32>
    %c0_1 = arith.constant 0 : index
    %c0_2 = arith.constant 0 : index
    %1 = vector.load %arg2[%c0_1, %c0_2] : memref<136x128xf32, #tpu.memory_space<vmem>>, vector<7x16xf32>
    %c8 = arith.constant 8 : index
    %c0_3 = arith.constant 0 : index
    %2 = vector.load %arg2[%c8, %c0_3] : memref<136x128xf32, #tpu.memory_space<vmem>>, vector<16x32xf32>
    %c24 = arith.constant 24 : index
    %c0_4 = arith.constant 0 : index
    %3 = vector.load %arg2[%c24, %c0_4] : memref<136x128xf32, #tpu.memory_space<vmem>>, vector<32x64xf32>
    %c56 = arith.constant 56 : index
    %c0_5 = arith.constant 0 : index
    %4 = vector.load %arg2[%c56, %c0_5] : memref<136x128xf32, #tpu.memory_space<vmem>>, vector<64x128xf32>
    %c120 = arith.constant 120 : index
    %c0_6 = arith.constant 0 : index
    %5 = vector.load %arg2[%c120, %c0_6] : memref<136x128xf32, #tpu.memory_space<vmem>>, vector<1x16xf32>
    %c121 = arith.constant 121 : index
    %c0_7 = arith.constant 0 : index
    %6 = vector.load %arg2[%c121, %c0_7] : memref<136x128xf32, #tpu.memory_space<vmem>>, vector<1x16xf32>
    %c122 = arith.constant 122 : index
    %c0_8 = arith.constant 0 : index
    %7 = vector.load %arg2[%c122, %c0_8] : memref<136x128xf32, #tpu.memory_space<vmem>>, vector<1x16xf32>
    %c123 = arith.constant 123 : index
    %c0_9 = arith.constant 0 : index
    %8 = vector.load %arg2[%c123, %c0_9] : memref<136x128xf32, #tpu.memory_space<vmem>>, vector<1x32xf32>
    %c124 = arith.constant 124 : index
    %c0_10 = arith.constant 0 : index
    %9 = vector.load %arg2[%c124, %c0_10] : memref<136x128xf32, #tpu.memory_space<vmem>>, vector<1x32xf32>
    %c125 = arith.constant 125 : index
    %c0_11 = arith.constant 0 : index
    %10 = vector.load %arg2[%c125, %c0_11] : memref<136x128xf32, #tpu.memory_space<vmem>>, vector<1x32xf32>
    %c126 = arith.constant 126 : index
    %c0_12 = arith.constant 0 : index
    %11 = vector.load %arg2[%c126, %c0_12] : memref<136x128xf32, #tpu.memory_space<vmem>>, vector<1x64xf32>
    %c127 = arith.constant 127 : index
    %c0_13 = arith.constant 0 : index
    %12 = vector.load %arg2[%c127, %c0_13] : memref<136x128xf32, #tpu.memory_space<vmem>>, vector<1x64xf32>
    %c128 = arith.constant 128 : index
    %c0_14 = arith.constant 0 : index
    %13 = vector.load %arg2[%c128, %c0_14] : memref<136x128xf32, #tpu.memory_space<vmem>>, vector<1x64xf32>
    %c129 = arith.constant 129 : index
    %c0_15 = arith.constant 0 : index
    %14 = vector.load %arg2[%c129, %c0_15] : memref<136x128xf32, #tpu.memory_space<vmem>>, vector<1x128xf32>
    %cst = arith.constant dense<0.000000e+00> : vector<8x16xf32>
    %15 = tpu.matmul %0, %1, %cst {dimension_numbers = #tpu.dot_dimension_numbers<[1], [0], [0], [1], [0, 0, 1, 1], [], []>} : vector<8x7xf32>, vector<7x16xf32>, vector<8x16xf32> -> vector<8x16xf32>
    %16 = vector.broadcast %5 : vector<1x16xf32> to vector<8x16xf32>
    %17 = arith.addf %15, %16 : vector<8x16xf32>
    %cst_16 = arith.constant dense<0.000000e+00> : vector<8xf32>
    %18 = vector.multi_reduction <add>, %17, %cst_16 [1] : vector<8x16xf32> to vector<8xf32>
    %19 = vector.shape_cast %18 : vector<8xf32> to vector<8x1xf32>
    %cst_17 = arith.constant 6.250000e-02 : f32
    %20 = vector.broadcast %cst_17 : f32 to vector<8x1xf32>
    %21 = arith.mulf %19, %20 : vector<8x1xf32>
    %22 = arith.mulf %17, %17 : vector<8x16xf32>
    %cst_18 = arith.constant dense<0.000000e+00> : vector<8xf32>
    %23 = vector.multi_reduction <add>, %22, %cst_18 [1] : vector<8x16xf32> to vector<8xf32>
    %24 = vector.shape_cast %23 : vector<8xf32> to vector<8x1xf32>
    %cst_19 = arith.constant 6.250000e-02 : f32
    %25 = vector.broadcast %cst_19 : f32 to vector<8x1xf32>
    %26 = arith.mulf %24, %25 : vector<8x1xf32>
    %27 = arith.mulf %21, %21 : vector<8x1xf32>
    %28 = arith.subf %26, %27 : vector<8x1xf32>
    %cst_20 = arith.constant 0.000000e+00 : f32
    %29 = vector.broadcast %cst_20 : f32 to vector<8x1xf32>
    %30 = arith.maximumf %28, %29 : vector<8x1xf32>
    %31 = vector.broadcast %21 : vector<8x1xf32> to vector<8x16xf32>
    %32 = arith.subf %17, %31 : vector<8x16xf32>
    %cst_21 = arith.constant 9.99999974E-6 : f32
    %33 = vector.broadcast %cst_21 : f32 to vector<8x1xf32>
    %34 = arith.addf %30, %33 : vector<8x1xf32>
    %35 = math.rsqrt %34 : vector<8x1xf32>
    %36 = vector.broadcast %35 : vector<8x1xf32> to vector<8x16xf32>
    %37 = arith.mulf %32, %36 : vector<8x16xf32>
    %38 = vector.broadcast %6 : vector<1x16xf32> to vector<8x16xf32>
    %39 = arith.mulf %37, %38 : vector<8x16xf32>
    %40 = vector.broadcast %7 : vector<1x16xf32> to vector<8x16xf32>
    %41 = arith.addf %39, %40 : vector<8x16xf32>
    %cst_22 = arith.constant 0.000000e+00 : f32
    %42 = vector.broadcast %cst_22 : f32 to vector<8x16xf32>
    %43 = arith.maximumf %41, %42 : vector<8x16xf32>
    %cst_23 = arith.constant dense<0.000000e+00> : vector<8x32xf32>
    %44 = tpu.matmul %43, %2, %cst_23 {dimension_numbers = #tpu.dot_dimension_numbers<[1], [0], [0], [1], [0, 0, 1, 1], [], []>} : vector<8x16xf32>, vector<16x32xf32>, vector<8x32xf32> -> vector<8x32xf32>
    %45 = vector.broadcast %8 : vector<1x32xf32> to vector<8x32xf32>
    %46 = arith.addf %44, %45 : vector<8x32xf32>
    %cst_24 = arith.constant dense<0.000000e+00> : vector<8xf32>
    %47 = vector.multi_reduction <add>, %46, %cst_24 [1] : vector<8x32xf32> to vector<8xf32>
    %48 = vector.shape_cast %47 : vector<8xf32> to vector<8x1xf32>
    %cst_25 = arith.constant 3.125000e-02 : f32
    %49 = vector.broadcast %cst_25 : f32 to vector<8x1xf32>
    %50 = arith.mulf %48, %49 : vector<8x1xf32>
    %51 = arith.mulf %46, %46 : vector<8x32xf32>
    %cst_26 = arith.constant dense<0.000000e+00> : vector<8xf32>
    %52 = vector.multi_reduction <add>, %51, %cst_26 [1] : vector<8x32xf32> to vector<8xf32>
    %53 = vector.shape_cast %52 : vector<8xf32> to vector<8x1xf32>
    %cst_27 = arith.constant 3.125000e-02 : f32
    %54 = vector.broadcast %cst_27 : f32 to vector<8x1xf32>
    %55 = arith.mulf %53, %54 : vector<8x1xf32>
    %56 = arith.mulf %50, %50 : vector<8x1xf32>
    %57 = arith.subf %55, %56 : vector<8x1xf32>
    %cst_28 = arith.constant 0.000000e+00 : f32
    %58 = vector.broadcast %cst_28 : f32 to vector<8x1xf32>
    %59 = arith.maximumf %57, %58 : vector<8x1xf32>
    %60 = vector.broadcast %50 : vector<8x1xf32> to vector<8x32xf32>
    %61 = arith.subf %46, %60 : vector<8x32xf32>
    %cst_29 = arith.constant 9.99999974E-6 : f32
    %62 = vector.broadcast %cst_29 : f32 to vector<8x1xf32>
    %63 = arith.addf %59, %62 : vector<8x1xf32>
    %64 = math.rsqrt %63 : vector<8x1xf32>
    %65 = vector.broadcast %64 : vector<8x1xf32> to vector<8x32xf32>
    %66 = arith.mulf %61, %65 : vector<8x32xf32>
    %67 = vector.broadcast %9 : vector<1x32xf32> to vector<8x32xf32>
    %68 = arith.mulf %66, %67 : vector<8x32xf32>
    %69 = vector.broadcast %10 : vector<1x32xf32> to vector<8x32xf32>
    %70 = arith.addf %68, %69 : vector<8x32xf32>
    %cst_30 = arith.constant 0.000000e+00 : f32
    %71 = vector.broadcast %cst_30 : f32 to vector<8x32xf32>
    %72 = arith.maximumf %70, %71 : vector<8x32xf32>
    %cst_31 = arith.constant dense<0.000000e+00> : vector<8x64xf32>
    %73 = tpu.matmul %72, %3, %cst_31 {dimension_numbers = #tpu.dot_dimension_numbers<[1], [0], [0], [1], [0, 0, 1, 1], [], []>} : vector<8x32xf32>, vector<32x64xf32>, vector<8x64xf32> -> vector<8x64xf32>
    %74 = vector.broadcast %11 : vector<1x64xf32> to vector<8x64xf32>
    %75 = arith.addf %73, %74 : vector<8x64xf32>
    %cst_32 = arith.constant dense<0.000000e+00> : vector<8xf32>
    %76 = vector.multi_reduction <add>, %75, %cst_32 [1] : vector<8x64xf32> to vector<8xf32>
    %77 = vector.shape_cast %76 : vector<8xf32> to vector<8x1xf32>
    %cst_33 = arith.constant 1.562500e-02 : f32
    %78 = vector.broadcast %cst_33 : f32 to vector<8x1xf32>
    %79 = arith.mulf %77, %78 : vector<8x1xf32>
    %80 = arith.mulf %75, %75 : vector<8x64xf32>
    %cst_34 = arith.constant dense<0.000000e+00> : vector<8xf32>
    %81 = vector.multi_reduction <add>, %80, %cst_34 [1] : vector<8x64xf32> to vector<8xf32>
    %82 = vector.shape_cast %81 : vector<8xf32> to vector<8x1xf32>
    %cst_35 = arith.constant 1.562500e-02 : f32
    %83 = vector.broadcast %cst_35 : f32 to vector<8x1xf32>
    %84 = arith.mulf %82, %83 : vector<8x1xf32>
    %85 = arith.mulf %79, %79 : vector<8x1xf32>
    %86 = arith.subf %84, %85 : vector<8x1xf32>
    %cst_36 = arith.constant 0.000000e+00 : f32
    %87 = vector.broadcast %cst_36 : f32 to vector<8x1xf32>
    %88 = arith.maximumf %86, %87 : vector<8x1xf32>
    %89 = vector.broadcast %79 : vector<8x1xf32> to vector<8x64xf32>
    %90 = arith.subf %75, %89 : vector<8x64xf32>
    %cst_37 = arith.constant 9.99999974E-6 : f32
    %91 = vector.broadcast %cst_37 : f32 to vector<8x1xf32>
    %92 = arith.addf %88, %91 : vector<8x1xf32>
    %93 = math.rsqrt %92 : vector<8x1xf32>
    %94 = vector.broadcast %93 : vector<8x1xf32> to vector<8x64xf32>
    %95 = arith.mulf %90, %94 : vector<8x64xf32>
    %96 = vector.broadcast %12 : vector<1x64xf32> to vector<8x64xf32>
    %97 = arith.mulf %95, %96 : vector<8x64xf32>
    %98 = vector.broadcast %13 : vector<1x64xf32> to vector<8x64xf32>
    %99 = arith.addf %97, %98 : vector<8x64xf32>
    %cst_38 = arith.constant 0.000000e+00 : f32
    %100 = vector.broadcast %cst_38 : f32 to vector<8x64xf32>
    %101 = arith.maximumf %99, %100 : vector<8x64xf32>
    %cst_39 = arith.constant dense<0.000000e+00> : vector<8x128xf32>
    %102 = tpu.matmul %101, %4, %cst_39 {dimension_numbers = #tpu.dot_dimension_numbers<[1], [0], [0], [1], [0, 0, 1, 1], [], []>} : vector<8x64xf32>, vector<64x128xf32>, vector<8x128xf32> -> vector<8x128xf32>
    %103 = vector.broadcast %14 : vector<1x128xf32> to vector<8x128xf32>
    %104 = arith.addf %102, %103 : vector<8x128xf32>
    %c0_40 = arith.constant 0 : index
    %c0_41 = arith.constant 0 : index
    %105 = vector.load %arg3[%c0_40, %c0_41] : memref<8x128xf32, #tpu.memory_space<vmem>>, vector<8x128xf32>
    tpu.vector_store %arg3[%c0_40, %c0_41], %104 {strides = array<i32>} : memref<8x128xf32, #tpu.memory_space<vmem>>, vector<8x128xf32>,
    return
  }
  func.func @transform_0(%arg0: i32) -> (i32, i32) {
    %c0_i32 = arith.constant 0 : i32
    %c0_i32_0 = arith.constant 0 : i32
    return %arg0, %c0_i32 : i32, i32
  }
  func.func @transform_1(%arg0: i32) -> (i32, i32) {
    %c0_i32 = arith.constant 0 : i32
    %c0_i32_0 = arith.constant 0 : i32
    %c0_i32_1 = arith.constant 0 : i32
    return %c0_i32, %c0_i32_0 : i32, i32
  }
  func.func @transform_2(%arg0: i32) -> (i32, i32) {
    %c0_i32 = arith.constant 0 : i32
    %c0_i32_0 = arith.constant 0 : i32
    return %arg0, %c0_i32 : i32, i32
  }
}

</mosaic_0001>

<llo_original>
// kernel: tpu_custom_call.1
$region0: #{tpu_custom_call.1}
  #allocation0 [shape = 'u32[]', space=smem, size = 0x4, offset = 0x4, fixed_abs, tag = 'smem constant byte address 0x4 - core index']
  #allocation1 [shape = 'u32[144,128]{1,0:T(1,128)}', space=vmem, size = 0x12000, scoped, tag = 'internal scratch']
  %s0 = inlined_call_operand.hbm [shape: f32[8,7], index: 0, kind: input, shape index: {}]
  %s1 = inlined_call_operand.hbm [shape: f32[136,128], index: 1, kind: input, shape index: {}]
  %s2 = inlined_call_operand.hbm [shape: f32[8,128], index: 2, kind: output, shape index: {}]
  %s3 = sld [smem:[#allocation0]]
  $region26: #{tpu_custom_call.1} parent=0
    _
  %s5 = ssub.s32 1, %s3
  %s6 = scalar_select 0, %s5, %s3
  $region1: #{tpu_custom_call.1} parent=0
    #allocation2 [shape = 'u8[4096]{0}', space=vmem, size = 0x1000, scoped, tag = 'input window, operand 0, single buffered']
    #allocation3 [shape = 's32[1]{0}', space=sflag, size = 0x4, scoped, tag = 'scoped memory for tpu_custom_call.1']
    #allocation4 [shape = 's32[1]{0}', space=sflag, size = 0x4, scoped, tag = 'scoped memory for tpu_custom_call.1']
    #allocation5 [shape = 'u8[69632]{0}', space=vmem, size = 0x11000, scoped, tag = 'input window, operand 1, single buffered']
    #allocation6 [shape = 's32[1]{0}', space=sflag, size = 0x4, scoped, tag = 'scoped memory for tpu_custom_call.1']
    #allocation7 [shape = 'u8[4096]{0}', space=vmem, size = 0x1000, scoped, tag = 'output window, operand 0, single buffered']
    %7 = vsyncpa [#allocation3], 0
    %8 = vsyncpa [#allocation6], 0
    %9 = vsyncpa [#allocation4], 0
    // Predicated region
    $region2: #{tpu_custom_call.1} parent=1 // pred_check
      _
    $region3: #{tpu_custom_call.1} parent=1 // pred_check_branch
      %11 = sbr.rel (0) target = $region5
    $region4: #{tpu_custom_call.1} parent=1 // pred_region
      %s13 = ssub.s32 128, 128
      %14 = vsyncadd [#allocation3], %s13
      %s16 = sshll.u32 [#allocation2], 4
      %s17 = int_to_ptr.vmem [resolvable:$true] %s16
      %19 = dma.hbm_to_vmem [thread:$0]  %s0, 128, %s17, [#allocation3]
    $region5: #{tpu_custom_call.1} parent=1 // pred_fallthru
      _
    // Predicated region
    $region6: #{tpu_custom_call.1} parent=1 // pred_check
      _
    $region7: #{tpu_custom_call.1} parent=1 // pred_check_branch
      %21 = sbr.rel (0) target = $region9
    $region8: #{tpu_custom_call.1} parent=1 // pred_region
      %s23 = ssub.s32 2176, 2176
      %24 = vsyncadd [#allocation6], %s23
      %s25 = sshll.u32 [#allocation5], 4
      %s26 = int_to_ptr.vmem [resolvable:$true] %s25
      %31 = dma.hbm_to_vmem [thread:$0]  %s1, 2176, %s26, [#allocation6], 128, 128, 8
    $region9: #{tpu_custom_call.1} parent=1 // pred_fallthru
      _
    // Predicated region
    $region10: #{tpu_custom_call.1} parent=1 // pred_check
      _
    $region11: #{tpu_custom_call.1} parent=1 // pred_check_branch
      %33 = sbr.rel (0) target = $region13
    $region12: #{tpu_custom_call.1} parent=1 // pred_region
      %34 = dma.done [#allocation3], 128
    $region13: #{tpu_custom_call.1} parent=1 // pred_fallthru
      _
    // Predicated region
    $region14: #{tpu_custom_call.1} parent=1 // pred_check
      _
    $region15: #{tpu_custom_call.1} parent=1 // pred_check_branch
      %36 = sbr.rel (0) target = $region17
    $region16: #{tpu_custom_call.1} parent=1 // pred_region
      %37 = dma.done [#allocation6], 2176
    $region17: #{tpu_custom_call.1} parent=1 // pred_fallthru
      _
    %v38 = vld [vmem:[#allocation2] sm:$0xff]
    %v39 = vld [vmem:[#allocation5] sm:$0x7f]
    %v40 = vld [vmem:[#allocation5 + $0x8] sm:$0xff]
    %v41 = vld [vmem:[#allocation5 + $0x10] sm:$0xff]
    %v42 = vld [vmem:[#allocation5 + $0x18] sm:$0xff]
    %v43 = vld [vmem:[#allocation5 + $0x20] sm:$0xff]
    %v44 = vld [vmem:[#allocation5 + $0x28] sm:$0xff]
    %v45 = vld [vmem:[#allocation5 + $0x30] sm:$0xff]
    %v46 = vld [vmem:[#allocation5 + $0x38] sm:$0xff]
    %v47 = vld [vmem:[#allocation5 + $0x40] sm:$0xff]
    %v48 = vld [vmem:[#allocation5 + $0x48] sm:$0xff]
    %v49 = vld [vmem:[#allocation5 + $0x50] sm:$0xff]
    %v50 = vld [vmem:[#allocation5 + $0x58] sm:$0xff]
    %v51 = vld [vmem:[#allocation5 + $0x60] sm:$0xff]
    %v52 = vld [vmem:[#allocation5 + $0x68] sm:$0xff]
    %v53 = vld [vmem:[#allocation5 + $0x70] sm:$0xff]
    %v54 = vld [vmem:[#allocation5 + $0x78] sm:$0x1]
    %v55 = vld [vmem:[#allocation5 + $0x79] sm:$0x1]
    %v56 = vld [vmem:[#allocation5 + $0x7a] sm:$0x1]
    %v57 = vld [vmem:[#allocation5 + $0x7b] sm:$0x1]
    %v58 = vld [vmem:[#allocation5 + $0x7c] sm:$0x1]
    %v59 = vld [vmem:[#allocation5 + $0x7d] sm:$0x1]
    %v60 = vld [vmem:[#allocation5 + $0x7e] sm:$0x1]
    %v61 = vld [vmem:[#allocation5 + $0x7f] sm:$0x1]
    %v62 = vld [vmem:[#allocation5 + $0x80] sm:$0x1]
    %v63 = vld [vmem:[#allocation5 + $0x81] sm:$0x1]
    %v64 = vlaneseq
    %v65 = vshrl.u32 %v64, 7
    %v66 = vsub.s32 0, %v65
    %v67 = vrot.slane %v54, %v66
    %vm68 = vcmask 56320
    %v70 = vsel %vm68, %v38, 0
    %vm72 = vcmask 1046528
    %v74 = vsel %vm72, %v39, 0
    %76 = vmatprep.subr.mxu0 0.0
    %77 = vmatpush1.msra.mxu0 %v74
    %78 = vmatprep.subr.mxu0 0.0
    %79 = vmatpush1.msra.mxu0 0.0
    %80 = vmatprep.subr.mxu0 0.0
    %81 = vmatpush1.msra.mxu0 0.0
    %82 = vmatprep.subr.mxu0 0.0
    %83 = vmatpush1.msra.mxu0 0.0
    %84 = vmatprep.subr.mxu0 0.0
    %85 = vmatpush1.msra.mxu0 0.0
    %86 = vmatprep.subr.mxu0 0.0
    %87 = vmatpush1.msra.mxu0 0.0
    %88 = vmatprep.subr.mxu0 0.0
    %89 = vmatpush1.msra.mxu0 0.0
    %90 = vmatprep.subr.mxu0 0.0
    %91 = vmatpush1.msra.mxu0 0.0
    %92 = vmatprep.subr.mxu0 0.0
    %93 = vmatpush1.msra.mxu0 0.0
    %94 = vmatprep.subr.mxu0 0.0
    %95 = vmatpush1.msra.mxu0 0.0
    %96 = vmatprep.subr.mxu0 0.0
    %97 = vmatpush1.msra.mxu0 0.0
    %98 = vmatprep.subr.mxu0 0.0
    %99 = vmatpush1.msra.mxu0 0.0
    %100 = vmatprep.subr.mxu0 0.0
    %101 = vmatpush1.msra.mxu0 0.0
    %102 = vmatprep.subr.mxu0 0.0
    %103 = vmatpush1.msra.mxu0 0.0
    %104 = vmatprep.subr.mxu0 0.0
    %105 = vmatpush1.msra.mxu0 0.0
    %106 = vmatprep.subr.mxu0 0.0
    %107 = vmatpush1.msra.mxu0 0.0
    %108 = vmatprep.subr.mxu0 0.0
    %109 = vmatpush1.msra.mxu0 0.0
    %110 = vmatprep.subr.mxu0 0.0
    %111 = vmatpush1.msra.mxu0 0.0
    %112 = vmatprep.subr.mxu0 0.0
    %113 = vmatpush1.msra.mxu0 0.0
    %114 = vmatprep.subr.mxu0 0.0
    %115 = vmatpush1.msra.mxu0 0.0
    %116 = vmatprep.subr.mxu0 0.0
    %117 = vmatpush1.msra.mxu0 0.0
    %118 = vmatprep.subr.mxu0 0.0
    %119 = vmatpush1.msra.mxu0 0.0
    %120 = vmatprep.subr.mxu0 0.0
    %121 = vmatpush1.msra.mxu0 0.0
    %122 = vmatprep.subr.mxu0 0.0
    %123 = vmatpush1.msra.mxu0 0.0
    %124 = vmatprep.subr.mxu0 0.0
    %125 = vmatpush1.msra.mxu0 0.0
    %126 = vmatprep.subr.mxu0 0.0
    %127 = vmatpush1.msra.mxu0 0.0
    %128 = vmatprep.subr.mxu0 0.0
    %129 = vmatpush1.msra.mxu0 0.0
    %130 = vmatprep.subr.mxu0 0.0
    %131 = vmatpush1.msra.mxu0 0.0
    %132 = vmatprep.subr.mxu0 0.0
    %133 = vmatpush1.msra.mxu0 0.0
    %134 = vmatprep.subr.mxu0 0.0
    %135 = vmatpush1.msra.mxu0 0.0
    %136 = vmatprep.subr.mxu0 0.0
    %137 = vmatpush1.msra.mxu0 0.0
    %138 = vmatprep.subr.mxu0 0.0
    %139 = vmatpush1.msra.mxu0 0.0
    %140 = vmatprep.mubr.f32.mxu0 0.0
    %141 = vmatmul.mubr.f32.gmra.mrb[0].mxu0 %v70
    %v142 = vpop.f32.mrb[0].mxu0
    %v143 = vadd.f32 %v67, %v142
    %v144 = vpop.f32.mrb[0].mxu0
    %145 = vdwg.mxu0
    %vm146 = vcmask 130048
    %v147 = vsel %vm146, %v143, 0.0
    %148 = vadd.xlane.f32.xlu0 %v147
    %v149 = vpop.xlane.xlu0 %148
    %v150 = vmul.f32 %v149, 0.0625
    %v151 = vmul.f32 %v143, %v143
    %v152 = vsel %vm146, %v151, 0.0
    %153 = vadd.xlane.f32.xlu0 %v152
    %v154 = vpop.xlane.xlu0 %153
    %v155 = vmul.f32 %v154, 0.0625
    %v156 = vmul.f32 %v150, %v150
    %v157 = vsub.f32 %v155, %v156
    %v158 = vmax.f32 %v157, 0.0
    %v159 = vsub.f32 %v143, %v150
    %v160 = vadd.f32 %v158, 1e-05
    %v161 = vrsqrt.pop %v160
    %v162 = vmul.f32 %v159, %v161
    %v163 = vlaneseq
    %v164 = vshrl.u32 %v163, 7
    %v165 = vsub.s32 0, %v164
    %v166 = vrot.slane %v55, %v165
    %v167 = vmul.f32 %v162, %v166
    %v168 = vlaneseq
    %v169 = vshrl.u32 %v168, 7
    %v170 = vsub.s32 0, %v169
    %v171 = vrot.slane %v56, %v170
    %v172 = vadd.f32 %v167, %v171
    %v173 = vmax.f32 %v172, 0.0
    %v174 = vlaneseq
    %v175 = vshrl.u32 %v174, 7
    %v176 = vsub.s32 0, %v175
    %v177 = vrot.slane %v57, %v176
    %v179 = vsel %vm146, %v173, 0
    %181 = vmatprep.subr.mxu0 0.0
    %182 = vmatpush1.msra.mxu0 %v40
    %183 = vmatprep.subr.mxu0 0.0
    %184 = vmatpush1.msra.mxu0 %v41
    %185 = vmatprep.subr.mxu0 0.0
    %186 = vmatpush1.msra.mxu0 0.0
    %187 = vmatprep.subr.mxu0 0.0
    %188 = vmatpush1.msra.mxu0 0.0
    %189 = vmatprep.subr.mxu0 0.0
    %190 = vmatpush1.msra.mxu0 0.0
    %191 = vmatprep.subr.mxu0 0.0
    %192 = vmatpush1.msra.mxu0 0.0
    %193 = vmatprep.subr.mxu0 0.0
    %194 = vmatpush1.msra.mxu0 0.0
    %195 = vmatprep.subr.mxu0 0.0
    %196 = vmatpush1.msra.mxu0 0.0
    %197 = vmatprep.subr.mxu0 0.0
    %198 = vmatpush1.msra.mxu0 0.0
    %199 = vmatprep.subr.mxu0 0.0
    %200 = vmatpush1.msra.mxu0 0.0
    %201 = vmatprep.subr.mxu0 0.0
    %202 = vmatpush1.msra.mxu0 0.0
    %203 = vmatprep.subr.mxu0 0.0
    %204 = vmatpush1.msra.mxu0 0.0
    %205 = vmatprep.subr.mxu0 0.0
    %206 = vmatpush1.msra.mxu0 0.0
    %207 = vmatprep.subr.mxu0 0.0
    %208 = vmatpush1.msra.mxu0 0.0
    %209 = vmatprep.subr.mxu0 0.0
    %210 = vmatpush1.msra.mxu0 0.0
    %211 = vmatprep.subr.mxu0 0.0
    %212 = vmatpush1.msra.mxu0 0.0
    %213 = vmatprep.subr.mxu0 0.0
    %214 = vmatpush1.msra.mxu0 0.0
    %215 = vmatprep.subr.mxu0 0.0
    %216 = vmatpush1.msra.mxu0 0.0
    %217 = vmatprep.subr.mxu0 0.0
    %218 = vmatpush1.msra.mxu0 0.0
    %219 = vmatprep.subr.mxu0 0.0
    %220 = vmatpush1.msra.mxu0 0.0
    %221 = vmatprep.subr.mxu0 0.0
    %222 = vmatpush1.msra.mxu0 0.0
    %223 = vmatprep.subr.mxu0 0.0
    %224 = vmatpush1.msra.mxu0 0.0
    %225 = vmatprep.subr.mxu0 0.0
    %226 = vmatpush1.msra.mxu0 0.0
    %227 = vmatprep.subr.mxu0 0.0
    %228 = vmatpush1.msra.mxu0 0.0
    %229 = vmatprep.subr.mxu0 0.0
    %230 = vmatpush1.msra.mxu0 0.0
    %231 = vmatprep.subr.mxu0 0.0
    %232 = vmatpush1.msra.mxu0 0.0
    %233 = vmatprep.subr.mxu0 0.0
    %234 = vmatpush1.msra.mxu0 0.0
    %235 = vmatprep.subr.mxu0 0.0
    %236 = vmatpush1.msra.mxu0 0.0
    %237 = vmatprep.subr.mxu0 0.0
    %238 = vmatpush1.msra.mxu0 0.0
    %239 = vmatprep.subr.mxu0 0.0
    %240 = vmatpush1.msra.mxu0 0.0
    %241 = vmatprep.subr.mxu0 0.0
    %242 = vmatpush1.msra.mxu0 0.0
    %243 = vmatprep.subr.mxu0 0.0
    %244 = vmatpush1.msra.mxu0 0.0
    %245 = vmatprep.mubr.f32.mxu0 0.0
    %246 = vmatmul.mubr.f32.gmra.mrb[0].mxu0 %v179
    %v247 = vpop.f32.mrb[0].mxu0
    %v248 = vadd.f32 %v177, %v247
    %v249 = vpop.f32.mrb[0].mxu0
    %250 = vdwg.mxu0
    %vm251 = vcmask 261120
    %v252 = vsel %vm251, %v248, 0.0
    %253 = vadd.xlane.f32.xlu0 %v252
    %v254 = vpop.xlane.xlu0 %253
    %v255 = vmul.f32 %v254, 0.03125
    %v256 = vmul.f32 %v248, %v248
    %v257 = vsel %vm251, %v256, 0.0
    %258 = vadd.xlane.f32.xlu0 %v257
    %v259 = vpop.xlane.xlu0 %258
    %v260 = vmul.f32 %v259, 0.03125
    %v261 = vmul.f32 %v255, %v255
    %v262 = vsub.f32 %v260, %v261
    %v263 = vmax.f32 %v262, 0.0
    %v264 = vsub.f32 %v248, %v255
    %v265 = vadd.f32 %v263, 1e-05
    %v266 = vrsqrt.pop %v265
    %v267 = vmul.f32 %v264, %v266
    %v268 = vlaneseq
    %v269 = vshrl.u32 %v268, 7
    %v270 = vsub.s32 0, %v269
    %v271 = vrot.slane %v58, %v270
    %v272 = vmul.f32 %v267, %v271
    %v273 = vlaneseq
    %v274 = vshrl.u32 %v273, 7
    %v275 = vsub.s32 0, %v274
    %v276 = vrot.slane %v59, %v275
    %v277 = vadd.f32 %v272, %v276
    %v278 = vmax.f32 %v277, 0.0
    %v279 = vlaneseq
    %v280 = vshrl.u32 %v279, 7
    %v281 = vsub.s32 0, %v280
    %v282 = vrot.slane %v60, %v281
    %v284 = vsel %vm251, %v278, 0
    %286 = vmatprep.subr.mxu0 0.0
    %287 = vmatpush1.msra.mxu0 %v42
    %288 = vmatprep.subr.mxu0 0.0
    %289 = vmatpush1.msra.mxu0 %v43
    %290 = vmatprep.subr.mxu0 0.0
    %291 = vmatpush1.msra.mxu0 %v44
    %292 = vmatprep.subr.mxu0 0.0
    %293 = vmatpush1.msra.mxu0 %v45
    %294 = vmatprep.subr.mxu0 0.0
    %295 = vmatpush1.msra.mxu0 0.0
    %296 = vmatprep.subr.mxu0 0.0
    %297 = vmatpush1.msra.mxu0 0.0
    %298 = vmatprep.subr.mxu0 0.0
    %299 = vmatpush1.msra.mxu0 0.0
    %300 = vmatprep.subr.mxu0 0.0
    %301 = vmatpush1.msra.mxu0 0.0
    %302 = vmatprep.subr.mxu0 0.0
    %303 = vmatpush1.msra.mxu0 0.0
    %304 = vmatprep.subr.mxu0 0.0
    %305 = vmatpush1.msra.mxu0 0.0
    %306 = vmatprep.subr.mxu0 0.0
    %307 = vmatpush1.msra.mxu0 0.0
    %308 = vmatprep.subr.mxu0 0.0
    %309 = vmatpush1.msra.mxu0 0.0
    %310 = vmatprep.subr.mxu0 0.0
    %311 = vmatpush1.msra.mxu0 0.0
    %312 = vmatprep.subr.mxu0 0.0
    %313 = vmatpush1.msra.mxu0 0.0
    %314 = vmatprep.subr.mxu0 0.0
    %315 = vmatpush1.msra.mxu0 0.0
    %316 = vmatprep.subr.mxu0 0.0
    %317 = vmatpush1.msra.mxu0 0.0
    %318 = vmatprep.subr.mxu0 0.0
    %319 = vmatpush1.msra.mxu0 0.0
    %320 = vmatprep.subr.mxu0 0.0
    %321 = vmatpush1.msra.mxu0 0.0
    %322 = vmatprep.subr.mxu0 0.0
    %323 = vmatpush1.msra.mxu0 0.0
    %324 = vmatprep.subr.mxu0 0.0
    %325 = vmatpush1.msra.mxu0 0.0
    %326 = vmatprep.subr.mxu0 0.0
    %327 = vmatpush1.msra.mxu0 0.0
    %328 = vmatprep.subr.mxu0 0.0
    %329 = vmatpush1.msra.mxu0 0.0
    %330 = vmatprep.subr.mxu0 0.0
    %331 = vmatpush1.msra.mxu0 0.0
    %332 = vmatprep.subr.mxu0 0.0
    %333 = vmatpush1.msra.mxu0 0.0
    %334 = vmatprep.subr.mxu0 0.0
    %335 = vmatpush1.msra.mxu0 0.0
    %336 = vmatprep.subr.mxu0 0.0
    %337 = vmatpush1.msra.mxu0 0.0
    %338 = vmatprep.subr.mxu0 0.0
    %339 = vmatpush1.msra.mxu0 0.0
    %340 = vmatprep.subr.mxu0 0.0
    %341 = vmatpush1.msra.mxu0 0.0
    %342 = vmatprep.subr.mxu0 0.0
    %343 = vmatpush1.msra.mxu0 0.0
    %344 = vmatprep.subr.mxu0 0.0
    %345 = vmatpush1.msra.mxu0 0.0
    %346 = vmatprep.subr.mxu0 0.0
    %347 = vmatpush1.msra.mxu0 0.0
    %348 = vmatprep.subr.mxu0 0.0
    %349 = vmatpush1.msra.mxu0 0.0
    %350 = vmatprep.mubr.f32.mxu0 0.0
    %351 = vmatmul.mubr.f32.gmra.mrb[0].mxu0 %v284
    %v352 = vpop.f32.mrb[0].mxu0
    %v353 = vadd.f32 %v282, %v352
    %v354 = vpop.f32.mrb[0].mxu0
    %355 = vdwg.mxu0
    %vm356 = vcmask 523264
    %v357 = vsel %vm356, %v353, 0.0
    %358 = vadd.xlane.f32.xlu0 %v357
    %v359 = vpop.xlane.xlu0 %358
    %v360 = vmul.f32 %v359, 0.015625
    %v361 = vmul.f32 %v353, %v353
    %v362 = vsel %vm356, %v361, 0.0
    %363 = vadd.xlane.f32.xlu0 %v362
    %v364 = vpop.xlane.xlu0 %363
    %v365 = vmul.f32 %v364, 0.015625
    %v366 = vmul.f32 %v360, %v360
    %v367 = vsub.f32 %v365, %v366
    %v368 = vmax.f32 %v367, 0.0
    %v369 = vsub.f32 %v353, %v360
    %v370 = vadd.f32 %v368, 1e-05
    %v371 = vrsqrt.pop %v370
    %v372 = vmul.f32 %v369, %v371
    %v373 = vlaneseq
    %v374 = vshrl.u32 %v373, 7
    %v375 = vsub.s32 0, %v374
    %v376 = vrot.slane %v61, %v375
    %v377 = vmul.f32 %v372, %v376
    %v378 = vlaneseq
    %v379 = vshrl.u32 %v378, 7
    %v380 = vsub.s32 0, %v379
    %v381 = vrot.slane %v62, %v380
    %v382 = vadd.f32 %v377, %v381
    %v383 = vmax.f32 %v382, 0.0
    %v384 = vlaneseq
    %v385 = vshrl.u32 %v384, 7
    %v386 = vsub.s32 0, %v385
    %v387 = vrot.slane %v63, %v386
    %v389 = vsel %vm356, %v383, 0
    %391 = vmatprep.subr.mxu0 0.0
    %392 = vmatpush1.msra.mxu0 %v46
    %393 = vmatprep.subr.mxu0 0.0
    %394 = vmatpush1.msra.mxu0 %v47
    %395 = vmatprep.subr.mxu0 0.0
    %396 = vmatpush1.msra.mxu0 %v48
    %397 = vmatprep.subr.mxu0 0.0
    %398 = vmatpush1.msra.mxu0 %v49
    %399 = vmatprep.subr.mxu0 0.0
    %400 = vmatpush1.msra.mxu0 %v50
    %401 = vmatprep.subr.mxu0 0.0
    %402 = vmatpush1.msra.mxu0 %v51
    %403 = vmatprep.subr.mxu0 0.0
    %404 = vmatpush1.msra.mxu0 %v52
    %405 = vmatprep.subr.mxu0 0.0
    %406 = vmatpush1.msra.mxu0 %v53
    %407 = vmatprep.subr.mxu0 0.0
    %408 = vmatpush1.msra.mxu0 0.0
    %409 = vmatprep.subr.mxu0 0.0
    %410 = vmatpush1.msra.mxu0 0.0
    %411 = vmatprep.subr.mxu0 0.0
    %412 = vmatpush1.msra.mxu0 0.0
    %413 = vmatprep.subr.mxu0 0.0
    %414 = vmatpush1.msra.mxu0 0.0
    %415 = vmatprep.subr.mxu0 0.0
    %416 = vmatpush1.msra.mxu0 0.0
    %417 = vmatprep.subr.mxu0 0.0
    %418 = vmatpush1.msra.mxu0 0.0
    %419 = vmatprep.subr.mxu0 0.0
    %420 = vmatpush1.msra.mxu0 0.0
    %421 = vmatprep.subr.mxu0 0.0
    %422 = vmatpush1.msra.mxu0 0.0
    %423 = vmatprep.subr.mxu0 0.0
    %424 = vmatpush1.msra.mxu0 0.0
    %425 = vmatprep.subr.mxu0 0.0
    %426 = vmatpush1.msra.mxu0 0.0
    %427 = vmatprep.subr.mxu0 0.0
    %428 = vmatpush1.msra.mxu0 0.0
    %429 = vmatprep.subr.mxu0 0.0
    %430 = vmatpush1.msra.mxu0 0.0
    %431 = vmatprep.subr.mxu0 0.0
    %432 = vmatpush1.msra.mxu0 0.0
    %433 = vmatprep.subr.mxu0 0.0
    %434 = vmatpush1.msra.mxu0 0.0
    %435 = vmatprep.subr.mxu0 0.0
    %436 = vmatpush1.msra.mxu0 0.0
    %437 = vmatprep.subr.mxu0 0.0
    %438 = vmatpush1.msra.mxu0 0.0
    %439 = vmatprep.subr.mxu0 0.0
    %440 = vmatpush1.msra.mxu0 0.0
    %441 = vmatprep.subr.mxu0 0.0
    %442 = vmatpush1.msra.mxu0 0.0
    %443 = vmatprep.subr.mxu0 0.0
    %444 = vmatpush1.msra.mxu0 0.0
    %445 = vmatprep.subr.mxu0 0.0
    %446 = vmatpush1.msra.mxu0 0.0
    %447 = vmatprep.subr.mxu0 0.0
    %448 = vmatpush1.msra.mxu0 0.0
    %449 = vmatprep.subr.mxu0 0.0
    %450 = vmatpush1.msra.mxu0 0.0
    %451 = vmatprep.subr.mxu0 0.0
    %452 = vmatpush1.msra.mxu0 0.0
    %453 = vmatprep.subr.mxu0 0.0
    %454 = vmatpush1.msra.mxu0 0.0
    %455 = vmatprep.mubr.f32.mxu0 0.0
    %456 = vmatmul.mubr.f32.gmra.mrb[0].mxu0 %v389
    %v457 = vpop.f32.mrb[0].mxu0
    %v458 = vadd.f32 %v387, %v457
    %v459 = vpop.f32.mrb[0].mxu0
    %460 = vdwg.mxu0
    %461 = vst [vmem:[#allocation7] sm:$0xff] %v458
    // Predicated region
    $region18: #{tpu_custom_call.1} parent=1 // pred_check
      _
    $region19: #{tpu_custom_call.1} parent=1 // pred_check_branch
      %463 = sbr.rel (0) target = $region21
    $region20: #{tpu_custom_call.1} parent=1 // pred_region
      %s465 = ssub.s32 128, 128
      %466 = vsyncadd [#allocation4], %s465
      %s468 = sshll.u32 [#allocation7], 4
      %s469 = int_to_ptr.vmem [resolvable:$true] %s468
      %471 = dma.vmem_to_hbm [thread:$0]  %s469, 128, %s2, [#allocation4]
    $region21: #{tpu_custom_call.1} parent=1 // pred_fallthru
      _
    // Predicated region
    $region22: #{tpu_custom_call.1} parent=1 // pred_check
      _
    $region23: #{tpu_custom_call.1} parent=1 // pred_check_branch
      %473 = sbr.rel (0) target = $region25
    $region24: #{tpu_custom_call.1} parent=1 // pred_region
      %474 = dma.done [#allocation4], 128
    $region25: #{tpu_custom_call.1} parent=1 // pred_fallthru
      _
    %475 = vsyncpa [#allocation3], 1
    %476 = vsyncpa [#allocation6], 1
    %477 = vsyncpa [#allocation4], 1

</llo_original>
